<compile_context>
chip_gen: v5e
topology: v5e:2x2
jax: 0.10.0
libtpu: 0.0.40
codegen_flags: <defaults>
</compile_context>

<pallas_src>
import jax
import jax.numpy as jnp
from jax.experimental import pallas as pl
from jax.experimental.pallas import tpu as pltpu


def _gelu_tanh(x):
    # OpenAI's gelu implementation (same constants as the torch.jit.script fn).
    return 0.5 * x * (1.0 + jnp.tanh(0.7978845608028654 * x * (1.0 + 0.044715 * x * x)))


def mlp_kernel(x_ref, w1_ref, b1_ref, w2_ref, b2_ref, o_ref):
    # x_ref:(tile_m,H) bf16   w1_ref:(H,tile_n) bf16   b1_ref:(1,tile_n) f32
    # w2_ref:(tile_n,H) bf16  b2_ref:(1,H) f32         o_ref:(tile_m,H) f32 (resident acc)
    k = pl.program_id(1)

    @pl.when(k == 0)
    def _():
        o_ref[...] = jnp.zeros_like(o_ref)

    # lin1 slab on the MXU (f32 accumulation), bias + gelu in f32 (tanh -> EUP).
    h = jnp.dot(x_ref[...], w1_ref[...], preferred_element_type=jnp.float32)
    h = _gelu_tanh(h + b1_ref[...])

    # lin2 partial product, accumulated over the 4H grid axis directly into the
    # VMEM-resident f32 output block (out index_map ignores k).
    o_ref[...] += jnp.dot(h.astype(w2_ref.dtype), w2_ref[...],
                          preferred_element_type=jnp.float32)

    @pl.when(k == pl.num_programs(1) - 1)
    def _():
        # TODO(synk): training-mode dropout (Bernoulli mask + 1/(1-p) scale via
        # pltpu.prng_*) not emitted; inference-mode dropout is the identity.
        o_ref[...] = o_ref[...] + b2_ref[...]


def _round_up(a, b):
    return ((a + b - 1) // b) * b


def _cdiv(a, b):
    return (a + b - 1) // b


def _best_tile(total, target, multiple):
    """Largest divisor of `total` that is a multiple of `multiple` and <= target.
    Falls back to `total` (full extent) if no such divisor exists."""
    best = None
    upper = min(total, max(target, multiple))
    d = multiple
    while d <= upper:
        if total % d == 0:
            best = d
        d += multiple
    return best if best is not None else total


def _tpu_generation():
    try:
        kind = jax.devices()[0].device_kind.lower()
    except Exception:
        return "unknown"
    if "v5" in kind:
        return "v5e"
    if "v6" in kind:
        return "v6e"
    if "7" in kind:
        return "v7x"
    return "unknown"


def _vmem_working_set(tile_m, tile_n, H, H4):
    # Double-buffered input/output blocks (bf16 x/w1/w2, f32 biases, f32 resident out).
    return 2 * (tile_m * H * 2       # x block (bf16)
                + H * tile_n * 2     # w1 slab (bf16)
                + tile_n * 4         # b1 slab (f32)
                + tile_n * H * 2     # w2 slab (bf16)
                + H * 4              # b2 (f32)
                + tile_m * H * 4)    # output block == f32 accumulator


def mlp_forward(x, w1, b1, w2, b2, *, tile_m=None, tile_n=None):
    """x: [B, S, H]; w1:[H,4H], b1:[1,4H], w2:[4H,H], b2:[1,H] (weights bf16 or f32)."""
    B, S, H = x.shape
    H4 = w1.shape[1]
    M = B * S

    gen = _tpu_generation()
    defaults = {
        # (tile_m_target, tile_n_target, mxu_multiple, assumed_vmem_cap)
        "v6e": (1024, 512, 256, 128 << 20),
        "v5e": (512, 512, 128, 128 << 20),
        "v7x": (512, 256, 256, 64 << 20),
        "unknown": (512, 256, 128, 64 << 20),
    }
    tm_target, tn_target, mxu_mult, cap_guess = defaults[gen]
    if tile_m is not None:
        tm_target = tile_m
    if tile_n is not None:
        tn_target = tile_n

    # VMEM budget from the actual chip when queryable, with compiler headroom.
    vmem_cap = None
    try:
        vmem_cap = int(pltpu.get_tpu_info().vmem_capacity_bytes)
    except Exception:
        pass
    if not vmem_cap:
        vmem_cap = cap_guess
    headroom = (8 << 20) if vmem_cap <= (64 << 20) else (24 << 20)
    vmem_limit = max(16 << 20, vmem_cap - headroom)

    # ---- legalize tile_m: multiple of 16 (bf16 sublanes), clamp to problem size,
    # and keep the parallel (M) axis at >= 2 steps when M is big enough (megacore).
    tm = min(tm_target, _round_up(M, 16))
    if M >= 2 * mxu_mult:
        tm = min(tm, _round_up(_cdiv(M, 2), mxu_mult))
    tm = max(16, tm)

    # ---- legalize tile_n: largest divisor of 4H that is a multiple of 128.
    tn = _best_tile(H4, tn_target, 128)

    # ---- shrink until the double-buffered working set fits the VMEM budget.
    while _vmem_working_set(tm, tn, H, H4) > vmem_limit:
        if tm > 256:
            tm = max(256, (tm // 2 // 16) * 16)
        elif tn > 128:
            new_tn = _best_tile(H4, tn // 2, 128)
            if new_tn == tn:
                break
            tn = new_tn
        else:
            break

    M_pad = _round_up(M, tm)

    # bf16 MXU operands; biases stay f32 (added on the f32 accumulator).
    # Weights are expected to already be bf16 (converted once at init).
    x_bf = x.reshape(M, H)
    if x_bf.dtype != jnp.bfloat16:
        x_bf = x_bf.astype(jnp.bfloat16)
    if M_pad != M:
        x_bf = jnp.pad(x_bf, ((0, M_pad - M), (0, 0)))
    w1_bf = w1 if w1.dtype == jnp.bfloat16 else w1.astype(jnp.bfloat16)
    w2_bf = w2 if w2.dtype == jnp.bfloat16 else w2.astype(jnp.bfloat16)
    b1_f = b1.astype(jnp.float32).reshape(1, -1)
    b2_f = b2.astype(jnp.float32).reshape(1, -1)

    grid = (M_pad // tm, H4 // tn)

    out2d = pl.pallas_call(
        mlp_kernel,
        out_shape=jax.ShapeDtypeStruct((M_pad, H), jnp.float32),
        grid_spec=pltpu.PrefetchScalarGridSpec(
            num_scalar_prefetch=0,
            grid=grid,
            in_specs=[
                pl.BlockSpec((tm, H), lambda i, k: (i, 0)),    # x rows tile
                pl.BlockSpec((H, tn), lambda i, k: (0, k)),    # w1 slab (streamed)
                pl.BlockSpec((1, tn), lambda i, k: (0, k)),    # b1 slab
                pl.BlockSpec((tn, H), lambda i, k: (k, 0)),    # w2 slab (streamed)
                pl.BlockSpec((1, H), lambda i, k: (0, 0)),     # b2
            ],
            out_specs=pl.BlockSpec((tm, H), lambda i, k: (i, 0)),  # resident accumulator
        ),
        compiler_params=pltpu.CompilerParams(
            dimension_semantics=("parallel", "arbitrary"),
            vmem_limit_bytes=int(vmem_limit),
        ),
    )(x_bf, w1_bf, b1_f, w2_bf, b2_f)

    return out2d[:M].reshape(B, S, H)


def init_mlp_params(key, hidden_dim):
    """Deterministic init matching nn.Linear shapes (stored transposed).
    Weights are stored in bf16 once at init (no per-call cast); biases stay f32."""
    h4 = 4 * hidden_dim
    k1, k2, k3, k4 = jax.random.split(key, 4)
    bound1 = 1.0 / (hidden_dim ** 0.5)
    bound2 = 1.0 / (h4 ** 0.5)
    w1 = jax.random.uniform(k1, (hidden_dim, h4), jnp.float32, -bound1, bound1)
    b1 = jax.random.uniform(k2, (1, h4), jnp.float32, -bound1, bound1)
    w2 = jax.random.uniform(k3, (h4, hidden_dim), jnp.float32, -bound2, bound2)
    b2 = jax.random.uniform(k4, (1, hidden_dim), jnp.float32, -bound2, bound2)
    return w1.astype(jnp.bfloat16), b1, w2.astype(jnp.bfloat16), b2


if __name__ == "__main__":
    key = jax.random.PRNGKey(0)
    # Small, lane-aligned demo: hidden=128 -> H4=512.  tile_n legalization keeps the
    # streamed-4H accumulation path; tile_m clamps to the 16 tokens present.
    batch, seq, hidden = 2, 8, 128

    kx, kp = jax.random.split(key)
    x = jax.random.normal(kx, (batch, seq, hidden), jnp.float32)
    w1, b1, w2, b2 = init_mlp_params(kp, hidden)

    out = mlp_forward(x, w1, b1, w2, b2, tile_n=256)  # 2-step 4H accumulation
    out = jax.block_until_ready(out)

    # Reference in plain JAX with the same bf16 operand rounding (f32 math).
    xb = x.reshape(-1, hidden).astype(jnp.bfloat16).astype(jnp.float32)
    w1f = w1.astype(jnp.float32)
    w2f = w2.astype(jnp.float32)
    h = _gelu_tanh(xb @ w1f + b1)
    h = h.astype(jnp.bfloat16).astype(jnp.float32)
    ref = (h @ w2f + b2).reshape(batch, seq, hidden)
    assert jnp.allclose(out, ref, atol=1e-2, rtol=1e-2), "mismatch vs reference"

    print("KERNEL_OK")
</pallas_src>

<mosaic_0001>
module attributes {stable_mosaic.version = 11 : i64} {
  func.func @mlp_kernel(%arg0: i32, %arg1: i32, %arg2: memref<16x128xbf16, #tpu.memory_space<vmem>>, %arg3: memref<128x256xbf16, #tpu.memory_space<vmem>>, %arg4: memref<1x256xf32, #tpu.memory_space<vmem>>, %arg5: memref<256x128xbf16, #tpu.memory_space<vmem>>, %arg6: memref<1x128xf32, #tpu.memory_space<vmem>>, %arg7: memref<16x128xf32, #tpu.memory_space<vmem>>) attributes {dimension_semantics = [#tpu.dimension_semantics<parallel>, #tpu.dimension_semantics<arbitrary>], iteration_bounds = array<i64: 1, 2>, scalar_prefetch = 0 : i64, scratch_operands = 0 : i64, tpu.core_type = #tpu.core_type<tc>, window_params = [{transform_indices = @transform_0, window_bounds = array<i64: 16, 128>}, {transform_indices = @transform_1, window_bounds = array<i64: 128, 256>}, {transform_indices = @transform_2, window_bounds = array<i64: 1, 256>}, {transform_indices = @transform_3, window_bounds = array<i64: 256, 128>}, {pipeline_mode = #tpu.pipeline_mode<synchronous>, transform_indices = @transform_4, window_bounds = array<i64: 1, 128>}, {transform_indices = @transform_5, window_bounds = array<i64: 16, 128>}]} {
    %c0_i32 = arith.constant 0 : i32
    %0 = arith.cmpi eq, %arg1, %c0_i32 : i32
    %1 = arith.extui %0 : i1 to i32
    %c0_i32_0 = arith.constant 0 : i32
    %2 = arith.cmpi ne, %1, %c0_i32_0 : i32
    scf.if %2 {
      %cst_19 = arith.constant 0.000000e+00 : f32
      %32 = vector.broadcast %cst_19 : f32 to vector<16x128xf32>
      %c0_20 = arith.constant 0 : index
      %c0_21 = arith.constant 0 : index
      %33 = vector.load %arg7[%c0_20, %c0_21] : memref<16x128xf32, #tpu.memory_space<vmem>>, vector<16x128xf32>
      tpu.vector_store %arg7[%c0_20, %c0_21], %32 {strides = array<i32>} : memref<16x128xf32, #tpu.memory_space<vmem>>, vector<16x128xf32>,
    } else {
    }
    %c0 = arith.constant 0 : index
    %c0_1 = arith.constant 0 : index
    %3 = vector.load %arg2[%c0, %c0_1] : memref<16x128xbf16, #tpu.memory_space<vmem>>, vector<16x128xbf16>
    %c0_2 = arith.constant 0 : index
    %c0_3 = arith.constant 0 : index
    %4 = vector.load %arg3[%c0_2, %c0_3] : memref<128x256xbf16, #tpu.memory_space<vmem>>, vector<128x256xbf16>
    %cst = arith.constant dense<0.000000e+00> : vector<16x256xf32>
    %5 = tpu.matmul %3, %4, %cst {dimension_numbers = #tpu.dot_dimension_numbers<[1], [0], [0], [1], [0, 0, 1, 1], [], []>} : vector<16x128xbf16>, vector<128x256xbf16>, vector<16x256xf32> -> vector<16x256xf32>
    %c0_4 = arith.constant 0 : index
    %c0_5 = arith.constant 0 : index
    %6 = vector.load %arg4[%c0_4, %c0_5] : memref<1x256xf32, #tpu.memory_space<vmem>>, vector<1x256xf32>
    %7 = vector.broadcast %6 : vector<1x256xf32> to vector<16x256xf32>
    %8 = arith.addf %5, %7 : vector<16x256xf32>
    %cst_6 = arith.constant 5.000000e-01 : f32
    %9 = vector.broadcast %cst_6 : f32 to vector<16x256xf32>
    %10 = arith.mulf %9, %8 : vector<16x256xf32>
    %cst_7 = arith.constant 0.797884583 : f32
    %11 = vector.broadcast %cst_7 : f32 to vector<16x256xf32>
    %12 = arith.mulf %11, %8 : vector<16x256xf32>
    %cst_8 = arith.constant 4.471500e-02 : f32
    %13 = vector.broadcast %cst_8 : f32 to vector<16x256xf32>
    %14 = arith.mulf %13, %8 : vector<16x256xf32>
    %15 = arith.mulf %14, %8 : vector<16x256xf32>
    %cst_9 = arith.constant 1.000000e+00 : f32
    %16 = vector.broadcast %cst_9 : f32 to vector<16x256xf32>
    %17 = arith.addf %16, %15 : vector<16x256xf32>
    %18 = arith.mulf %12, %17 : vector<16x256xf32>
    %19 = math.tanh %18 : vector<16x256xf32>
    %cst_10 = arith.constant 1.000000e+00 : f32
    %20 = vector.broadcast %cst_10 : f32 to vector<16x256xf32>
    %21 = arith.addf %20, %19 : vector<16x256xf32>
    %22 = arith.mulf %10, %21 : vector<16x256xf32>
    %c0_11 = arith.constant 0 : index
    %c0_12 = arith.constant 0 : index
    %23 = vector.load %arg7[%c0_11, %c0_12] : memref<16x128xf32, #tpu.memory_space<vmem>>, vector<16x128xf32>
    %24 = arith.truncf %22 : vector<16x256xf32> to vector<16x256xbf16>
    %c0_13 = arith.constant 0 : index
    %c0_14 = arith.constant 0 : index
    %25 = vector.load %arg5[%c0_13, %c0_14] : memref<256x128xbf16, #tpu.memory_space<vmem>>, vector<256x128xbf16>
    %cst_15 = arith.constant dense<0.000000e+00> : vector<16x128xf32>
    %26 = tpu.matmul %24, %25, %cst_15 {dimension_numbers = #tpu.dot_dimension_numbers<[1], [0], [0], [1], [0, 0, 1, 1], [], []>} : vector<16x256xbf16>, vector<256x128xbf16>, vector<16x128xf32> -> vector<16x128xf32>
    %27 = arith.addf %23, %26 : vector<16x128xf32>
    %c0_16 = arith.constant 0 : index
    %c0_17 = arith.constant 0 : index
    %28 = vector.load %arg7[%c0_16, %c0_17] : memref<16x128xf32, #tpu.memory_space<vmem>>, vector<16x128xf32>
    tpu.vector_store %arg7[%c0_16, %c0_17], %27 {strides = array<i32>} : memref<16x128xf32, #tpu.memory_space<vmem>>, vector<16x128xf32>,
    %c1_i32 = arith.constant 1 : i32
    %29 = arith.cmpi eq, %arg1, %c1_i32 : i32
    %30 = arith.extui %29 : i1 to i32
    %c0_i32_18 = arith.constant 0 : i32
    %31 = arith.cmpi ne, %30, %c0_i32_18 : i32
    scf.if %31 {
      %c0_19 = arith.constant 0 : index
      %c0_20 = arith.constant 0 : index
      %32 = vector.load %arg7[%c0_19, %c0_20] : memref<16x128xf32, #tpu.memory_space<vmem>>, vector<16x128xf32>
      %c0_21 = arith.constant 0 : index
      %c0_22 = arith.constant 0 : index
      %33 = vector.load %arg6[%c0_21, %c0_22] : memref<1x128xf32, #tpu.memory_space<vmem>>, vector<1x128xf32>
      %34 = vector.broadcast %33 : vector<1x128xf32> to vector<16x128xf32>
      %35 = arith.addf %32, %34 : vector<16x128xf32>
      %c0_23 = arith.constant 0 : index
      %c0_24 = arith.constant 0 : index
      %36 = vector.load %arg7[%c0_23, %c0_24] : memref<16x128xf32, #tpu.memory_space<vmem>>, vector<16x128xf32>
      tpu.vector_store %arg7[%c0_23, %c0_24], %35 {strides = array<i32>} : memref<16x128xf32, #tpu.memory_space<vmem>>, vector<16x128xf32>,
    } else {
    }
    return
  }
  func.func @transform_0(%arg0: i32, %arg1: i32) -> (i32, i32) {
    %c0_i32 = arith.constant 0 : i32
    %c0_i32_0 = arith.constant 0 : i32
    return %arg0, %c0_i32 : i32, i32
  }
  func.func @transform_1(%arg0: i32, %arg1: i32) -> (i32, i32) {
    %c0_i32 = arith.constant 0 : i32
    %c0_i32_0 = arith.constant 0 : i32
    return %c0_i32, %arg1 : i32, i32
  }
  func.func @transform_2(%arg0: i32, %arg1: i32) -> (i32, i32) {
    %c0_i32 = arith.constant 0 : i32
    %c0_i32_0 = arith.constant 0 : i32
    return %c0_i32, %arg1 : i32, i32
  }
  func.func @transform_3(%arg0: i32, %arg1: i32) -> (i32, i32) {
    %c0_i32 = arith.constant 0 : i32
    %c0_i32_0 = arith.constant 0 : i32
    return %arg1, %c0_i32 : i32, i32
  }
  func.func @transform_4(%arg0: i32, %arg1: i32) -> (i32, i32) {
    %c0_i32 = arith.constant 0 : i32
    %c0_i32_0 = arith.constant 0 : i32
    %c0_i32_1 = arith.constant 0 : i32
    return %c0_i32, %c0_i32_0 : i32, i32
  }
  func.func @transform_5(%arg0: i32, %arg1: i32) -> (i32, i32) {
    %c0_i32 = arith.constant 0 : i32
    %c0_i32_0 = arith.constant 0 : i32
    return %arg0, %c0_i32 : i32, i32
  }
}

</mosaic_0001>

<llo_original>
// kernel: tpu_custom_call.1
$region0: #{tpu_custom_call.1}
  #allocation0 [shape = 'u32[]', space=smem, size = 0x4, offset = 0x4, fixed_abs, tag = 'smem constant byte address 0x4 - core index']
  #allocation1 [shape = 'u32[72,128]{1,0:T(1,128)}', space=vmem, size = 0x9000, scoped, tag = 'internal scratch']
  %s0 = inlined_call_operand.hbm [shape: bf16[16,128], index: 0, kind: input, shape index: {}]
  %s1 = inlined_call_operand.hbm [shape: bf16[128,512], index: 1, kind: input, shape index: {}]
  %s2 = inlined_call_operand.hbm [shape: f32[1,512], index: 2, kind: input, shape index: {}]
  %s3 = inlined_call_operand.hbm [shape: bf16[512,128], index: 3, kind: input, shape index: {}]
  %s4 = inlined_call_operand.vmem [shape: f32[1,128], index: 4, kind: input, shape index: {}]
  %s5 = inlined_call_operand.hbm [shape: f32[16,128], index: 5, kind: output, shape index: {}]
  %s6 = sld [smem:[#allocation0]]
  $region77: #{tpu_custom_call.1} parent=0
    _
  %s8 = ssub.s32 1, %s6
  %s9 = scalar_select 0, %s8, %s6
  $region1: #{tpu_custom_call.1} parent=0
    #allocation2 [shape = 'u8[4096]{0}', space=vmem, size = 0x1000, scoped, tag = 'input window, operand 0, single buffered']
    #allocation3 [shape = 's32[2]{0}', space=sflag, size = 0x8, scoped, tag = 'scoped memory for tpu_custom_call.1']
    #allocation4 [shape = 's32[2]{0}', space=sflag, size = 0x8, scoped, tag = 'scoped memory for tpu_custom_call.1']
    #allocation5 [shape = 'u8[131072]{0}', space=vmem, size = 0x20000, scoped, tag = 'input window, operand 1']
    #allocation6 [shape = 's32[2]{0}', space=sflag, size = 0x8, scoped, tag = 'scoped memory for tpu_custom_call.1']
    #allocation7 [shape = 'u8[2048]{0}', space=vmem, size = 0x800, scoped, tag = 'input window, operand 2']
    #allocation8 [shape = 'u8[131072]{0}', space=vmem, size = 0x20000, scoped, tag = 'input window, operand 3']
    #allocation9 [shape = 's32[2]{0}', space=sflag, size = 0x8, scoped, tag = 'scoped memory for tpu_custom_call.1']
    #allocation10 [shape = 'u8[8192]{0}', space=vmem, size = 0x2000, scoped, tag = 'output window, operand 0, single buffered']
    %10 = vsyncpa [#allocation3], 0
    %11 = vsyncpa [#allocation6], 0
    %s12 = scalar_lea.sflag [#allocation6], 1
    %13 = vsyncpa %s12, 0
    %14 = vsyncpa [#allocation9], 0
    %s15 = scalar_lea.sflag [#allocation9], 1
    %16 = vsyncpa %s15, 0
    %17 = vsyncpa [#allocation4], 0
    loop: start=0, step=1, limit=4
    $region2: #{tpu_custom_call.1} parent=1 // loop_pre_header
      _
    $region3: #{tpu_custom_call.1} parent=1 // loop_header
      %s19 = sphi 0, %s23
      %p20 = scmp.ge.s32.totalorder %s19, 4
      %s26 = sphi 0, %s38
      %s27 = sphi 0, %s34
      %s28 = sphi 0, %s26
      %s29 = sphi 0, %s27
      %s30 = sphi 0, %s28
      %s31 = sphi 0, %s29
      %s41 = sphi 0, %s43
      %s44 = sphi 0, %s41
      %s45 = sphi 0, %s44
      %s61 = sphi 0, %s45
      %s67 = sphi 0, %s69
      %s70 = sphi 0, %s67
      %s71 = sphi 0, %s70
      %s87 = sphi 0, %s71
      %s93 = sphi 0, %s95
      %s96 = sphi 0, %s93
      %s97 = sphi 0, %s96
      %s113 = sphi 0, %s97
      %s119 = sphi 0, %s121
      %s122 = sphi 0, %s119
      %s123 = sphi 0, %s122
      %s139 = sphi 0, %s123
      %s143 = sphi 0, %s143
      %s145 = sphi 0, %s143
      %s146 = sphi 0, %s145
      %s160 = sphi 0, %s146
      %s166 = sphi 0, %s168
      %s169 = sphi 0, %s166
      %s170 = sphi 0, %s169
      %s186 = sphi 0, %s170
    $region4: #{tpu_custom_call.1} parent=1 // loop_header_branch
      %22 = sbr.rel (%p20) target = $region8
    $region5: #{tpu_custom_call.1} parent=1 // loop_body
      %s24 = ssub.s32 %s19, 1
      %s25 = ssub.s32 %s19, 2
      %s32 = sadd.s32 1, %s27
      %p33 = scmp.ge.s32.totalorder %s32, 2
      %s34 = scalar_select %p33, 0, %s32
      %s35 = sadd.s32 1, %s26
      %s36 = scalar_select %p33, %s35, %s26
      %p37 = scmp.ge.s32.totalorder %s36, 1
      %s38 = scalar_select %p37, 0, %s36
      %s39 = ssub.s32 %s26, %s38
      %p40 = scmp.eq.s32.totalorder %s39, 0
      %s42 = sadd.s32 %s41, 1
      %s43 = scalar_select %p40, %s41, %s42
      %p46 = pneg %p40
      %p47 = scmp.eq.s32.totalorder %s19, 1
      %p48 = por %p46, %p47
      %p49 = scmp.ne.s32.totalorder %s41, %s44
      %p50 = scmp.eq.s32.totalorder %s19, 0
      %p51 = por %p49, %p50
      %p52 = scmp.ne.s32.totalorder %s41, %s44
      %p53 = scmp.eq.s32.totalorder %s24, 1
      %p54 = por %p52, %p53
      %p55 = scmp.ne.s32.totalorder %s44, %s45
      %p56 = scmp.eq.s32.totalorder %s24, 0
      %p57 = por %p55, %p56
      %p58 = scmp.ne.s32.totalorder %s44, %s45
      %p59 = scmp.eq.s32.totalorder %s25, 1
      %p60 = por %p58, %p59
      %p62 = scmp.ne.s32.totalorder %s45, %s61
      %p63 = scmp.eq.s32.totalorder %s25, 0
      %p64 = por %p62, %p63
      %s65 = ssub.s32 %s27, %s34
      %p66 = scmp.eq.s32.totalorder %s65, 0
      %s68 = sadd.s32 %s67, 1
      %s69 = scalar_select %p66, %s67, %s68
      %p72 = pneg %p66
      %p73 = scmp.eq.s32.totalorder %s19, 1
      %p74 = por %p72, %p73
      %p75 = scmp.ne.s32.totalorder %s67, %s70
      %p76 = scmp.eq.s32.totalorder %s19, 0
      %p77 = por %p75, %p76
      %p78 = scmp.ne.s32.totalorder %s67, %s70
      %p79 = scmp.eq.s32.totalorder %s24, 1
      %p80 = por %p78, %p79
      %p81 = scmp.ne.s32.totalorder %s70, %s71
      %p82 = scmp.eq.s32.totalorder %s24, 0
      %p83 = por %p81, %p82
      %p84 = scmp.ne.s32.totalorder %s70, %s71
      %p85 = scmp.eq.s32.totalorder %s25, 1
      %p86 = por %p84, %p85
      %p88 = scmp.ne.s32.totalorder %s71, %s87
      %p89 = scmp.eq.s32.totalorder %s25, 0
      %p90 = por %p88, %p89
      %s91 = ssub.s32 %s27, %s34
      %p92 = scmp.eq.s32.totalorder %s91, 0
      %s94 = sadd.s32 %s93, 1
      %s95 = scalar_select %p92, %s93, %s94
      %p98 = pneg %p92
      %p99 = scmp.eq.s32.totalorder %s19, 1
      %p100 = por %p98, %p99
      %p101 = scmp.ne.s32.totalorder %s93, %s96
      %p102 = scmp.eq.s32.totalorder %s19, 0
      %p103 = por %p101, %p102
      %p104 = scmp.ne.s32.totalorder %s93, %s96
      %p105 = scmp.eq.s32.totalorder %s24, 1
      %p106 = por %p104, %p105
      %p107 = scmp.ne.s32.totalorder %s96, %s97
      %p108 = scmp.eq.s32.totalorder %s24, 0
      %p109 = por %p107, %p108
      %p110 = scmp.ne.s32.totalorder %s96, %s97
      %p111 = scmp.eq.s32.totalorder %s25, 1
      %p112 = por %p110, %p111
      %p114 = scmp.ne.s32.totalorder %s97, %s113
      %p115 = scmp.eq.s32.totalorder %s25, 0
      %p116 = por %p114, %p115
      %s117 = ssub.s32 %s27, %s34
      %p118 = scmp.eq.s32.totalorder %s117, 0
      %s120 = sadd.s32 %s119, 1
      %s121 = scalar_select %p118, %s119, %s120
      %p124 = pneg %p118
      %p125 = scmp.eq.s32.totalorder %s19, 1
      %p126 = por %p124, %p125
      %p127 = scmp.ne.s32.totalorder %s119, %s122
      %p128 = scmp.eq.s32.totalorder %s19, 0
      %p129 = por %p127, %p128
      %p130 = scmp.ne.s32.totalorder %s119, %s122
      %p131 = scmp.eq.s32.totalorder %s24, 1
      %p132 = por %p130, %p131
      %p133 = scmp.ne.s32.totalorder %s122, %s123
      %p134 = scmp.eq.s32.totalorder %s24, 0
      %p135 = por %p133, %p134
      %p136 = scmp.ne.s32.totalorder %s122, %s123
      %p137 = scmp.eq.s32.totalorder %s25, 1
      %p138 = por %p136, %p137
      %p140 = scmp.ne.s32.totalorder %s123, %s139
      %p141 = scmp.eq.s32.totalorder %s25, 0
      %p142 = por %p140, %p141
      %s144 = sadd.s32 %s143, 1
      %p147 = scmp.eq.s32.totalorder %s19, 1
      %p148 = scmp.ne.s32.totalorder %s143, %s145
      %p149 = scmp.eq.s32.totalorder %s19, 0
      %p150 = por %p148, %p149
      %p151 = scmp.ne.s32.totalorder %s143, %s145
      %p152 = scmp.eq.s32.totalorder %s24, 1
      %p153 = por %p151, %p152
      %p154 = scmp.ne.s32.totalorder %s145, %s146
      %p155 = scmp.eq.s32.totalorder %s24, 0
      %p156 = por %p154, %p155
      %p157 = scmp.ne.s32.totalorder %s145, %s146
      %p158 = scmp.eq.s32.totalorder %s25, 1
      %p159 = por %p157, %p158
      %p161 = scmp.ne.s32.totalorder %s146, %s160
      %p162 = scmp.eq.s32.totalorder %s25, 0
      %p163 = por %p161, %p162
      %s164 = ssub.s32 %s26, %s38
      %p165 = scmp.eq.s32.totalorder %s164, 0
      %s167 = sadd.s32 %s166, 1
      %s168 = scalar_select %p165, %s166, %s167
      %p171 = pneg %p165
      %p172 = scmp.eq.s32.totalorder %s19, 1
      %p173 = por %p171, %p172
      %p174 = scmp.ne.s32.totalorder %s166, %s169
      %p175 = scmp.eq.s32.totalorder %s19, 0
      %p176 = por %p174, %p175
      %p177 = scmp.ne.s32.totalorder %s166, %s169
      %p178 = scmp.eq.s32.totalorder %s24, 1
      %p179 = por %p177, %p178
      %p180 = scmp.ne.s32.totalorder %s169, %s170
      %p181 = scmp.eq.s32.totalorder %s24, 0
      %p182 = por %p180, %p181
      %p183 = scmp.ne.s32.totalorder %s169, %s170
      %p184 = scmp.eq.s32.totalorder %s25, 1
      %p185 = por %p183, %p184
      %p187 = scmp.ne.s32.totalorder %s170, %s186
      %p188 = scmp.eq.s32.totalorder %s25, 0
      %p189 = por %p187, %p188
      %p190 = scmp.le.s32.totalorder 1, %s19
      %p191 = scmp.lt.s32.totalorder %s19, 3
      %p192 = pnand %p190, %p191
      %p193 = pneg %p192
      // Predicated region
      $region9: #{tpu_custom_call.1} parent=5 // pred_check
        _
      $region10: #{tpu_custom_call.1} parent=5 // pred_check_branch
        %195 = sbr.rel (%p192) target = $region12
      $region11: #{tpu_custom_call.1} parent=5 // pred_region
        %s196 = ssub.s32 %s19, 1
        // Predicated region
        $region13: #{tpu_custom_call.1} parent=11 // pred_check
          %p197 = pneg %p57
        $region14: #{tpu_custom_call.1} parent=11 // pred_check_branch
          %199 = sbr.rel (%p197) target = $region16
        $region15: #{tpu_custom_call.1} parent=11 // pred_region
          %s200 = smul.u32 2, %s28
          %202 = vsyncadd [#allocation3], 0
          %s203 = smul.addr %s200, 4
          %s204 = scalar_lea.hbm %s0, %s203
          %s205 = sshll.u32 %s204, 4
          %s206 = int_to_ptr.hbm [resolvable:$true] %s205
          %s207 = sshll.u32 [#allocation2], 4
          %s208 = int_to_ptr.vmem [resolvable:$true] %s207
          %213 = dma.hbm_to_vmem [thread:$0]  %s206, 128, %s208, [#allocation3], 64, 64, 4
        $region16: #{tpu_custom_call.1} parent=11 // pred_fallthru
          _
        // Predicated region
        $region17: #{tpu_custom_call.1} parent=11 // pred_check
          %p214 = pneg %p156
        $region18: #{tpu_custom_call.1} parent=11 // pred_check_branch
          %216 = sbr.rel (%p214) target = $region20
        $region19: #{tpu_custom_call.1} parent=11 // pred_region
          _
        $region20: #{tpu_custom_call.1} parent=11 // pred_fallthru
          _
      $region12: #{tpu_custom_call.1} parent=5 // pred_fallthru
        _
      %p217 = scmp.lt.s32.totalorder %s19, 2
      // Predicated region
      $region21: #{tpu_custom_call.1} parent=5 // pred_check
        %p218 = pneg %p217
      $region22: #{tpu_custom_call.1} parent=5 // pred_check_branch
        %220 = sbr.rel (%p218) target = $region24
      $region23: #{tpu_custom_call.1} parent=5 // pred_region
        // Predicated region
        $region25: #{tpu_custom_call.1} parent=23 // pred_check
          %p221 = pneg %p77
        $region26: #{tpu_custom_call.1} parent=23 // pred_check_branch
          %223 = sbr.rel (%p221) target = $region28
        $region27: #{tpu_custom_call.1} parent=23 // pred_region
          %s224 = sand.u32 %s19, 1
          %s225 = scalar_lea.sflag [#allocation6], %s224
          %s226 = sand.u32 %s67, 1
          %s227 = smul.addr %s226, 128
          %s228 = scalar_lea.vmem [#allocation5], %s227
          %s229 = smul.u32 2, %s27
          %231 = vsyncadd %s225, 0
          %s232 = smul.addr %s229, 4
          %s233 = scalar_lea.hbm %s1, %s232
          %s234 = sshll.u32 %s233, 4
          %s235 = int_to_ptr.hbm [resolvable:$true] %s234
          %s236 = sshll.u32 %s228, 4
          %s237 = int_to_ptr.vmem [resolvable:$true] %s236
          %242 = dma.hbm_to_vmem [thread:$0]  %s235, 2048, %s237, %s225, 256, 128, 8
        $region28: #{tpu_custom_call.1} parent=23 // pred_fallthru
          _
        // Predicated region
        $region29: #{tpu_custom_call.1} parent=23 // pred_check
          %p243 = pneg %p103
        $region30: #{tpu_custom_call.1} parent=23 // pred_check_branch
          %245 = sbr.rel (%p243) target = $region32
        $region31: #{tpu_custom_call.1} parent=23 // pred_region
          %s246 = sand.u32 %s19, 1
          %s247 = scalar_lea.sflag [#allocation6], %s246
          %s248 = sand.u32 %s93, 1
          %s249 = smul.addr %s248, 2
          %s250 = scalar_lea.vmem [#allocation7], %s249
          %s251 = smul.u32 2, %s27
          %253 = vsyncadd %s247, 0
          %s254 = scalar_lea.hbm %s2, %s251
          %s256 = sshll.u32 %s254, 4
          %s257 = int_to_ptr.hbm [resolvable:$true] %s256
          %s258 = sshll.u32 %s250, 4
          %s259 = int_to_ptr.vmem [resolvable:$true] %s258
          %261 = dma.hbm_to_vmem [thread:$0]  %s257, 32, %s259, %s247
        $region32: #{tpu_custom_call.1} parent=23 // pred_fallthru
          _
        // Predicated region
        $region33: #{tpu_custom_call.1} parent=23 // pred_check
          %p262 = pneg %p129
        $region34: #{tpu_custom_call.1} parent=23 // pred_check_branch
          %264 = sbr.rel (%p262) target = $region36
        $region35: #{tpu_custom_call.1} parent=23 // pred_region
          %s265 = sand.u32 %s119, 1
          %s266 = scalar_lea.sflag [#allocation9], %s265
          %s267 = sand.u32 %s119, 1
          %s268 = smul.addr %s267, 128
          %s269 = scalar_lea.vmem [#allocation8], %s268
          %s270 = smul.u32 32, %s27
          %272 = vsyncadd %s266, 0
          %s273 = smul.addr %s270, 4
          %s274 = scalar_lea.hbm %s3, %s273
          %s275 = sshll.u32 %s274, 4
          %s276 = int_to_ptr.hbm [resolvable:$true] %s275
          %s277 = sshll.u32 %s269, 4
          %s278 = int_to_ptr.vmem [resolvable:$true] %s277
          %283 = dma.hbm_to_vmem [thread:$0]  %s276, 2048, %s278, %s266, 64, 64, 4
        $region36: #{tpu_custom_call.1} parent=23 // pred_fallthru
          _
      $region24: #{tpu_custom_call.1} parent=5 // pred_fallthru
        _
      %p284 = scmp.le.s32.totalorder 1, %s19
      %p285 = scmp.lt.s32.totalorder %s19, 3
      %p286 = pnand %p284, %p285
      %p287 = pneg %p286
      // Predicated region
      $region37: #{tpu_custom_call.1} parent=5 // pred_check
        _
      $region38: #{tpu_custom_call.1} parent=5 // pred_check_branch
        %289 = sbr.rel (%p286) target = $region40
      $region39: #{tpu_custom_call.1} parent=5 // pred_region
        %s290 = ssub.s32 %s19, 1
        // Predicated region
        $region41: #{tpu_custom_call.1} parent=39 // pred_check
          %p291 = pneg %p57
        $region42: #{tpu_custom_call.1} parent=39 // pred_check_branch
          %293 = sbr.rel (%p291) target = $region44
        $region43: #{tpu_custom_call.1} parent=39 // pred_region
          %295 = dma.done [#allocation3], 128
        $region44: #{tpu_custom_call.1} parent=39 // pred_fallthru
          _
        %s296 = sand.u32 %s24, 1
        %s297 = scalar_lea.sflag [#allocation6], %s296
        %s298 = sand.u32 %s70, 1
        %s299 = smul.addr %s298, 128
        %s300 = scalar_lea.vmem [#allocation5], %s299
        // Predicated region
        $region45: #{tpu_custom_call.1} parent=39 // pred_check
          %p301 = pneg %p83
        $region46: #{tpu_custom_call.1} parent=39 // pred_check_branch
          %303 = sbr.rel (%p301) target = $region48
        $region47: #{tpu_custom_call.1} parent=39 // pred_region
          %305 = dma.done %s297, 2048
        $region48: #{tpu_custom_call.1} parent=39 // pred_fallthru
          _
        %s306 = sand.u32 %s24, 1
        %s307 = scalar_lea.sflag [#allocation6], %s306
        %s308 = sand.u32 %s96, 1
        %s309 = smul.addr %s308, 2
        %s310 = scalar_lea.vmem [#allocation7], %s309
        // Predicated region
        $region49: #{tpu_custom_call.1} parent=39 // pred_check
          %p311 = pneg %p109
        $region50: #{tpu_custom_call.1} parent=39 // pred_check_branch
          %313 = sbr.rel (%p311) target = $region52
        $region51: #{tpu_custom_call.1} parent=39 // pred_region
          %315 = dma.done %s307, 32
        $region52: #{tpu_custom_call.1} parent=39 // pred_fallthru
          _
        %s316 = sand.u32 %s122, 1
        %s317 = scalar_lea.sflag [#allocation9], %s316
        %s318 = sand.u32 %s122, 1
        %s319 = smul.addr %s318, 128
        %s320 = scalar_lea.vmem [#allocation8], %s319
        // Predicated region
        $region53: #{tpu_custom_call.1} parent=39 // pred_check
          %p321 = pneg %p135
        $region54: #{tpu_custom_call.1} parent=39 // pred_check_branch
          %323 = sbr.rel (%p321) target = $region56
        $region55: #{tpu_custom_call.1} parent=39 // pred_region
          %325 = dma.done %s317, 2048
        $region56: #{tpu_custom_call.1} parent=39 // pred_fallthru
          _
        %p326 = pneg %p57
        %p327 = pneg %p54
        %s328 = sand.u32 %s24, 1
        %s329 = scalar_lea.sflag [#allocation6], %s328
        %s330 = sand.u32 %s70, 1
        %s331 = smul.addr %s330, 128
        %s332 = scalar_lea.vmem [#allocation5], %s331
        %p333 = pneg %p83
        %p334 = pneg %p80
        %s335 = sand.u32 %s24, 1
        %s336 = scalar_lea.sflag [#allocation6], %s335
        %s337 = sand.u32 %s96, 1
        %s338 = smul.addr %s337, 2
        %s339 = scalar_lea.vmem [#allocation7], %s338
        %p340 = pneg %p109
        %p341 = pneg %p106
        %s342 = sand.u32 %s122, 1
        %s343 = scalar_lea.sflag [#allocation9], %s342
        %s344 = sand.u32 %s122, 1
        %s345 = smul.addr %s344, 128
        %s346 = scalar_lea.vmem [#allocation8], %s345
        %p347 = pneg %p135
        %p348 = pneg %p132
        %p349 = pneg %p156
        %p350 = pneg %p153
        %p351 = pneg %p182
        %p352 = pneg %p179
        %s353 = smul.u32 2, %s28
        %s354 = smul.u32 2, %s29
        %s355 = smul.u32 2, %s29
        %s356 = smul.u32 32, %s29
        %s357 = smul.u32 2, %s28
        %p358 = scmp.eq.s32.totalorder %s29, 0
        // Predicated region
        $region57: #{tpu_custom_call.1} parent=39 // pred_check
          %p359 = pneg %p358
        $region58: #{tpu_custom_call.1} parent=39 // pred_check_branch
          %361 = sbr.rel (%p359) target = $region60
        $region59: #{tpu_custom_call.1} parent=39 // pred_region
          %362 = vst [vmem:[#allocation10] sm:$0xff] 0.0
          %363 = vst [vmem:[#allocation10 + $0x8] sm:$0xff] 0.0
        $region60: #{tpu_custom_call.1} parent=39 // pred_fallthru
          _
        %v364 = vld [vmem:[#allocation2] sm:$0xf]
        %v365 = vld [vmem:[#allocation2 + $0x4] sm:$0xf]
        %v366 = vld [vmem:[%s300] sm:$0xff]
        %v367 = vld [vmem:[%s300 + $0x8] sm:$0xff]
        %v368 = vld [vmem:[%s300 + $0x10] sm:$0xff]
        %v369 = vld [vmem:[%s300 + $0x18] sm:$0xff]
        %v370 = vld [vmem:[%s300 + $0x20] sm:$0xff]
        %v371 = vld [vmem:[%s300 + $0x28] sm:$0xff]
        %v372 = vld [vmem:[%s300 + $0x30] sm:$0xff]
        %v373 = vld [vmem:[%s300 + $0x38] sm:$0xff]
        %v374 = vld [vmem:[%s300 + $0x40] sm:$0xff]
        %v375 = vld [vmem:[%s300 + $0x48] sm:$0xff]
        %v376 = vld [vmem:[%s300 + $0x50] sm:$0xff]
        %v377 = vld [vmem:[%s300 + $0x58] sm:$0xff]
        %v378 = vld [vmem:[%s300 + $0x60] sm:$0xff]
        %v379 = vld [vmem:[%s300 + $0x68] sm:$0xff]
        %v380 = vld [vmem:[%s300 + $0x70] sm:$0xff]
        %v381 = vld [vmem:[%s300 + $0x78] sm:$0xff]
        %v382 = vld [vmem:[%s310] sm:$0x3]
        %v384 = vperm.slane %v382, 0
        %v385 = vperm.slane %v382, 1
        %v390 = vunpack.c.l.b16 %v364
        %v391 = vunpack.c.l.b16 %v365
        %v392 = vpack.c.b16 %v391, %v390
        %v410 = vunpack.c.l.b16 %v366
        %v411 = vunpack.c.h.b16 %v366
        %v412 = vunpack.c.l.b16 %v367
        %v413 = vunpack.c.h.b16 %v367
        %v414 = vunpack.c.l.b16 %v368
        %v415 = vunpack.c.h.b16 %v368
        %v416 = vunpack.c.l.b16 %v369
        %v417 = vunpack.c.h.b16 %v369
        %v418 = vunpack.c.l.b16 %v370
        %v419 = vunpack.c.h.b16 %v370
        %v420 = vunpack.c.l.b16 %v371
        %v421 = vunpack.c.h.b16 %v371
        %v422 = vunpack.c.l.b16 %v372
        %v423 = vunpack.c.h.b16 %v372
        %v424 = vunpack.c.l.b16 %v373
        %v425 = vunpack.c.h.b16 %v373
        %v426 = vunpack.c.l.b16 %v374
        %v427 = vunpack.c.h.b16 %v374
        %v428 = vunpack.c.l.b16 %v375
        %v429 = vunpack.c.h.b16 %v375
        %v430 = vunpack.c.l.b16 %v376
        %v431 = vunpack.c.h.b16 %v376
        %v432 = vunpack.c.l.b16 %v377
        %v433 = vunpack.c.h.b16 %v377
        %v434 = vunpack.c.l.b16 %v378
        %v435 = vunpack.c.h.b16 %v378
        %v436 = vunpack.c.l.b16 %v379
        %v437 = vunpack.c.h.b16 %v379
        %v438 = vunpack.c.l.b16 %v380
        %v439 = vunpack.c.h.b16 %v380
        %v440 = vunpack.c.l.b16 %v381
        %v441 = vunpack.c.h.b16 %v381
        %v442 = vpack.c.b16 %v412, %v410
        %v443 = vpack.c.b16 %v413, %v411
        %v444 = vpack.c.b16 %v416, %v414
        %v445 = vpack.c.b16 %v417, %v415
        %v446 = vpack.c.b16 %v420, %v418
        %v447 = vpack.c.b16 %v421, %v419
        %v448 = vpack.c.b16 %v424, %v422
        %v449 = vpack.c.b16 %v425, %v423
        %v450 = vpack.c.b16 %v428, %v426
        %v451 = vpack.c.b16 %v429, %v427
        %v452 = vpack.c.b16 %v432, %v430
        %v453 = vpack.c.b16 %v433, %v431
        %v454 = vpack.c.b16 %v436, %v434
        %v455 = vpack.c.b16 %v437, %v435
        %v456 = vpack.c.b16 %v440, %v438
        %v457 = vpack.c.b16 %v441, %v439
        %474 = vmatpush.bf16.msra.mxu0 %v456
        %475 = vmatpush.bf16.msra.mxu0 %v454
        %476 = vmatpush.bf16.msra.mxu0 %v452
        %477 = vmatpush.bf16.msra.mxu0 %v450
        %478 = vmatpush.bf16.msra.mxu0 %v448
        %479 = vmatpush.bf16.msra.mxu0 %v446
        %480 = vmatpush.bf16.msra.mxu0 %v444
        %481 = vmatpush.bf16.msra.mxu0 %v442
        %482 = vmatmul.bf16.gmra.mxu0 %v392
        %v483 = vpop.f32.mrf.mxu0
        %v484 = vadd.f32 %v384, %v483
        %v485 = vpop.f32.mrf.mxu0
        %v486 = vadd.f32 %v384, %v485
        %487 = vdwg.mxu0
        %488 = vmatpush.bf16.msra.mxu0 %v457
        %489 = vmatpush.bf16.msra.mxu0 %v455
        %490 = vmatpush.bf16.msra.mxu0 %v453
        %491 = vmatpush.bf16.msra.mxu0 %v451
        %492 = vmatpush.bf16.msra.mxu0 %v449
        %493 = vmatpush.bf16.msra.mxu0 %v447
        %494 = vmatpush.bf16.msra.mxu0 %v445
        %495 = vmatpush.bf16.msra.mxu0 %v443
        %496 = vmatmul.bf16.gmra.mxu0 %v392
        %v497 = vpop.f32.mrf.mxu0
        %v498 = vadd.f32 %v385, %v497
        %v499 = vpop.f32.mrf.mxu0
        %v500 = vadd.f32 %v385, %v499
        %501 = vdwg.mxu0
        %v502 = vmul.f32 %v484, 0.5
        %v503 = vmul.f32 %v498, 0.5
        %v504 = vmul.f32 %v486, 0.5
        %v505 = vmul.f32 %v500, 0.5
        %v506 = vmul.f32 %v484, 0.7978846
        %v507 = vmul.f32 %v498, 0.7978846
        %v508 = vmul.f32 %v486, 0.7978846
        %v509 = vmul.f32 %v500, 0.7978846
        %v510 = vmul.f32 %v484, 0.044715
        %v511 = vmul.f32 %v498, 0.044715
        %v512 = vmul.f32 %v486, 0.044715
        %v513 = vmul.f32 %v500, 0.044715
        %v514 = vmul.f32 %v510, %v484
        %v515 = vmul.f32 %v511, %v498
        %v516 = vmul.f32 %v512, %v486
        %v517 = vmul.f32 %v513, %v500
        %v518 = vadd.f32 %v514, 1.0
        %v519 = vadd.f32 %v515, 1.0
        %v520 = vadd.f32 %v516, 1.0
        %v521 = vadd.f32 %v517, 1.0
        %v522 = vmul.f32 %v506, %v518
        %v523 = vmul.f32 %v507, %v519
        %v524 = vmul.f32 %v508, %v520
        %v525 = vmul.f32 %v509, %v521
        %v526 = vtanh.pop %v522
        %v527 = vtanh.pop %v523
        %v528 = vtanh.pop %v524
        %v529 = vtanh.pop %v525
        %v530 = vadd.f32 %v526, 1.0
        %v531 = vadd.f32 %v527, 1.0
        %v532 = vadd.f32 %v528, 1.0
        %v533 = vadd.f32 %v529, 1.0
        %v534 = vmul.f32 %v502, %v530
        %v535 = vmul.f32 %v503, %v531
        %v536 = vmul.f32 %v504, %v532
        %v537 = vmul.f32 %v505, %v533
        %v538 = vld [vmem:[#allocation10] sm:$0xff]
        %v539 = vld [vmem:[#allocation10 + $0x8] sm:$0xff]
        %v540 = vpack.c.bf16 %v536, %v534
        %v541 = vpack.c.bf16 %v537, %v535
        %v542 = vld [vmem:[%s320] sm:$0xf]
        %v543 = vld [vmem:[%s320 + $0x4] sm:$0xf]
        %v544 = vld [vmem:[%s320 + $0x8] sm:$0xf]
        %v545 = vld [vmem:[%s320 + $0xc] sm:$0xf]
        %v546 = vld [vmem:[%s320 + $0x10] sm:$0xf]
        %v547 = vld [vmem:[%s320 + $0x14] sm:$0xf]
        %v548 = vld [vmem:[%s320 + $0x18] sm:$0xf]
        %v549 = vld [vmem:[%s320 + $0x1c] sm:$0xf]
        %v550 = vld [vmem:[%s320 + $0x20] sm:$0xf]
        %v551 = vld [vmem:[%s320 + $0x24] sm:$0xf]
        %v552 = vld [vmem:[%s320 + $0x28] sm:$0xf]
        %v553 = vld [vmem:[%s320 + $0x2c] sm:$0xf]
        %v554 = vld [vmem:[%s320 + $0x30] sm:$0xf]
        %v555 = vld [vmem:[%s320 + $0x34] sm:$0xf]
        %v556 = vld [vmem:[%s320 + $0x38] sm:$0xf]
        %v557 = vld [vmem:[%s320 + $0x3c] sm:$0xf]
        %v558 = vld [vmem:[%s320 + $0x40] sm:$0xf]
        %v559 = vld [vmem:[%s320 + $0x44] sm:$0xf]
        %v560 = vld [vmem:[%s320 + $0x48] sm:$0xf]
        %v561 = vld [vmem:[%s320 + $0x4c] sm:$0xf]
        %v562 = vld [vmem:[%s320 + $0x50] sm:$0xf]
        %v563 = vld [vmem:[%s320 + $0x54] sm:$0xf]
        %v564 = vld [vmem:[%s320 + $0x58] sm:$0xf]
        %v565 = vld [vmem:[%s320 + $0x5c] sm:$0xf]
        %v566 = vld [vmem:[%s320 + $0x60] sm:$0xf]
        %v567 = vld [vmem:[%s320 + $0x64] sm:$0xf]
        %v568 = vld [vmem:[%s320 + $0x68] sm:$0xf]
        %v569 = vld [vmem:[%s320 + $0x6c] sm:$0xf]
        %v570 = vld [vmem:[%s320 + $0x70] sm:$0xf]
        %v571 = vld [vmem:[%s320 + $0x74] sm:$0xf]
        %v572 = vld [vmem:[%s320 + $0x78] sm:$0xf]
        %v573 = vld [vmem:[%s320 + $0x7c] sm:$0xf]
        %v606 = vunpack.c.l.b16 %v542
        %v607 = vunpack.c.l.b16 %v543
        %v608 = vunpack.c.l.b16 %v544
        %v609 = vunpack.c.l.b16 %v545
        %v610 = vunpack.c.l.b16 %v546
        %v611 = vunpack.c.l.b16 %v547
        %v612 = vunpack.c.l.b16 %v548
        %v613 = vunpack.c.l.b16 %v549
        %v614 = vunpack.c.l.b16 %v550
        %v615 = vunpack.c.l.b16 %v551
        %v616 = vunpack.c.l.b16 %v552
        %v617 = vunpack.c.l.b16 %v553
        %v618 = vunpack.c.l.b16 %v554
        %v619 = vunpack.c.l.b16 %v555
        %v620 = vunpack.c.l.b16 %v556
        %v621 = vunpack.c.l.b16 %v557
        %v622 = vunpack.c.l.b16 %v558
        %v623 = vunpack.c.l.b16 %v559
        %v624 = vunpack.c.l.b16 %v560
        %v625 = vunpack.c.l.b16 %v561
        %v626 = vunpack.c.l.b16 %v562
        %v627 = vunpack.c.l.b16 %v563
        %v628 = vunpack.c.l.b16 %v564
        %v629 = vunpack.c.l.b16 %v565
        %v630 = vunpack.c.l.b16 %v566
        %v631 = vunpack.c.l.b16 %v567
        %v632 = vunpack.c.l.b16 %v568
        %v633 = vunpack.c.l.b16 %v569
        %v634 = vunpack.c.l.b16 %v570
        %v635 = vunpack.c.l.b16 %v571
        %v636 = vunpack.c.l.b16 %v572
        %v637 = vunpack.c.l.b16 %v573
        %v638 = vpack.c.b16 %v607, %v606
        %v639 = vpack.c.b16 %v609, %v608
        %v640 = vpack.c.b16 %v611, %v610
        %v641 = vpack.c.b16 %v613, %v612
        %v642 = vpack.c.b16 %v615, %v614
        %v643 = vpack.c.b16 %v617, %v616
        %v644 = vpack.c.b16 %v619, %v618
        %v645 = vpack.c.b16 %v621, %v620
        %v646 = vpack.c.b16 %v623, %v622
        %v647 = vpack.c.b16 %v625, %v624
        %v648 = vpack.c.b16 %v627, %v626
        %v649 = vpack.c.b16 %v629, %v628
        %v650 = vpack.c.b16 %v631, %v630
        %v651 = vpack.c.b16 %v633, %v632
        %v652 = vpack.c.b16 %v635, %v634
        %v653 = vpack.c.b16 %v637, %v636
        %670 = vmatpush.bf16.msra.mxu0 %v645
        %671 = vmatpush.bf16.msra.mxu0 %v644
        %672 = vmatpush.bf16.msra.mxu0 %v643
        %673 = vmatpush.bf16.msra.mxu0 %v642
        %674 = vmatpush.bf16.msra.mxu0 %v641
        %675 = vmatpush.bf16.msra.mxu0 %v640
        %676 = vmatpush.bf16.msra.mxu0 %v639
        %677 = vmatpush.bf16.msra.mxu0 %v638
        %678 = vmatmul.bf16.gmra.mxu0 %v540
        %v679 = vpop.f32.mrf.mxu0
        %v680 = vadd.f32 0.0, %v679
        %v681 = vpop.f32.mrf.mxu0
        %v682 = vadd.f32 0.0, %v681
        %683 = vdwg.mxu0
        %684 = vmatpush.bf16.msra.mxu0 %v653
        %685 = vmatpush.bf16.msra.mxu0 %v652
        %686 = vmatpush.bf16.msra.mxu0 %v651
        %687 = vmatpush.bf16.msra.mxu0 %v650
        %688 = vmatpush.bf16.msra.mxu0 %v649
        %689 = vmatpush.bf16.msra.mxu0 %v648
        %690 = vmatpush.bf16.msra.mxu0 %v647
        %691 = vmatpush.bf16.msra.mxu0 %v646
        %692 = vmatmul.bf16.gmra.mxu0 %v541
        %v693 = vpop.f32.mrf.mxu0
        %v694 = vadd.f32 %v680, %v693
        %v695 = vpop.f32.mrf.mxu0
        %v696 = vadd.f32 %v682, %v695
        %697 = vdwg.mxu0
        %v698 = vadd.f32 %v538, %v694
        %v699 = vadd.f32 %v539, %v696
        %700 = vst [vmem:[#allocation10] sm:$0xff] %v698
        %701 = vst [vmem:[#allocation10 + $0x8] sm:$0xff] %v699
        %p702 = scmp.eq.s32.totalorder %s29, 1
        // Predicated region
        $region61: #{tpu_custom_call.1} parent=39 // pred_check
          %p703 = pneg %p702
        $region62: #{tpu_custom_call.1} parent=39 // pred_check_branch
          %705 = sbr.rel (%p703) target = $region64
        $region63: #{tpu_custom_call.1} parent=39 // pred_region
          %v706 = vld [vmem:[#allocation10] sm:$0xff]
          %v707 = vld [vmem:[#allocation10 + $0x8] sm:$0xff]
          %v708 = vld [vmem:[%s4] sm:$0x1]
          %v710 = vperm.slane %v708, 0
          %v712 = vadd.f32 %v706, %v710
          %v713 = vadd.f32 %v707, %v710
          %714 = vst [vmem:[#allocation10] sm:$0xff] %v712
          %715 = vst [vmem:[#allocation10 + $0x8] sm:$0xff] %v713
        $region64: #{tpu_custom_call.1} parent=39 // pred_fallthru
          _
        // Predicated region
        $region65: #{tpu_custom_call.1} parent=39 // pred_check
          %p716 = pneg %p179
        $region66: #{tpu_custom_call.1} parent=39 // pred_check_branch
          %718 = sbr.rel (%p716) target = $region68
        $region67: #{tpu_custom_call.1} parent=39 // pred_region
          %s719 = smul.u32 2, %s28
          %721 = vsyncadd [#allocation4], 0
          %s722 = smul.addr %s719, 8
          %s723 = scalar_lea.hbm %s5, %s722
          %s724 = sshll.u32 [#allocation10], 4
          %s725 = int_to_ptr.vmem [resolvable:$true] %s724
          %s726 = sshll.u32 %s723, 4
          %s727 = int_to_ptr.hbm [resolvable:$true] %s726
          %732 = dma.vmem_to_hbm [thread:$0]  %s725, 256, %s727, [#allocation4], 128, 128, 8
        $region68: #{tpu_custom_call.1} parent=39 // pred_fallthru
          _
        // Predicated region
        $region69: #{tpu_custom_call.1} parent=39 // pred_check
          %p733 = pneg %p179
        $region70: #{tpu_custom_call.1} parent=39 // pred_check_branch
          %735 = sbr.rel (%p733) target = $region72
        $region71: #{tpu_custom_call.1} parent=39 // pred_region
          %737 = dma.done [#allocation4], 256
        $region72: #{tpu_custom_call.1} parent=39 // pred_fallthru
          _
      $region40: #{tpu_custom_call.1} parent=5 // pred_fallthru
        _
      %p738 = scmp.le.s32.totalorder 2, %s19
      // Predicated region
      $region73: #{tpu_custom_call.1} parent=5 // pred_check
        %p739 = pneg %p738
      $region74: #{tpu_custom_call.1} parent=5 // pred_check_branch
        %741 = sbr.rel (%p739) target = $region76
      $region75: #{tpu_custom_call.1} parent=5 // pred_region
        %s742 = ssub.s32 %s19, 2
      $region76: #{tpu_custom_call.1} parent=5 // pred_fallthru
        _
    $region6: #{tpu_custom_call.1} parent=1 // loop_footer
      %s23 = sadd.s32 1, %s19
    $region7: #{tpu_custom_call.1} parent=1 // loop_footer_branch
      %18 = sbr.rel target = $region3
    $region8: #{tpu_custom_call.1} parent=1 // loop_exit
      _
    %743 = vsyncpa [#allocation3], 1
    %s744 = scalar_lea.sflag [#allocation3], 1
    %745 = vsyncpa %s744, 1
    %746 = vsyncpa [#allocation6], 1
    %s747 = scalar_lea.sflag [#allocation6], 1
    %748 = vsyncpa %s747, 1
    %749 = vsyncpa [#allocation9], 1
    %s750 = scalar_lea.sflag [#allocation9], 1
    %751 = vsyncpa %s750, 1
    %752 = vsyncpa [#allocation4], 1
    %s753 = scalar_lea.sflag [#allocation4], 1
    %754 = vsyncpa %s753, 1

</llo_original>
